<compile_context>
chip_gen: v7x
topology: tpu7x:2x2x1
jax: 0.10.0
libtpu: 0.0.40
codegen_flags: <defaults>
</compile_context>

<pallas_src>
from functools import partial

import jax
import jax.numpy as jnp
from jax import lax
from jax.experimental import pallas as pl
from jax.experimental.pallas import tpu as pltpu

EPS = 1e-5                  # nn.GroupNorm default
MXU_MIN_C = 16              # below this, the 1x1 conv runs on the VPU
_MIB = 1024 * 1024
_TILE_CANDIDATES = (16384, 8192, 4096, 2048, 1024, 512, 256, 128)


def _tpu_budgets():
    """(physical_vmem, scoped_vmem_limit) derived per TPU generation."""
    phys = 64 * _MIB  # conservative fallback (v7x-sized) if query unavailable
    try:
        info = pltpu.get_tpu_info()
        cap = int(getattr(info, "vmem_capacity_bytes", 0))
        if cap > 0:
            phys = cap
    except Exception:
        pass
    # v7x (64 MiB physical) -> 48 MiB scoped; v5e/v6e (128 MiB) -> 96 MiB.
    vmem_limit = min(int(phys * 3 // 4), 96 * _MIB)
    return phys, vmem_limit


def _num_tensorcores():
    """Best-effort TC count (v7x has 2); 1 if unknown."""
    try:
        info = pltpu.get_tpu_info()
        for attr in ("num_tensorcores", "tensorcores_per_chip", "num_cores",
                     "core_count"):
            v = getattr(info, attr, None)
            if isinstance(v, int) and v > 0:
                return v
    except Exception:
        pass
    return 1


def _conv1x1(xn, w, b, use_mxu):
    """1x1 conv on a normalized (C_in, HW) f32 tile with folded weights/bias."""
    if use_mxu:
        # w is pre-cast to bf16 on the host; f32 accumulation on the MXU.
        y = jnp.dot(w, xn.astype(jnp.bfloat16), preferred_element_type=jnp.float32)
    else:
        # Tiny C: unrolled broadcast-FMA on the VPU (no (C,C,HW) temporary,
        # no K-starved MXU matmul).
        c_in = w.shape[1]
        y = w[:, 0:1] * xn[0:1, :]
        for c in range(1, c_in):
            y = y + w[:, c:c + 1] * xn[c:c + 1, :]
    return y + b  # b: (C_out, 1), broadcast over HW


def _fused_kernel(x_ref, w_ref, b_ref, o_ref, *, inv_n, use_mxu, chunk):
    """Single-pass GroupNorm + folded 1x1 conv on one whole (C, HW) slab.

    The slab is VMEM-resident; both sweeps are chunked over HW so f32/x*x/xn
    temporaries stay chunk-sized (bounds VMEM, especially on v7x).
    """
    C, HW = x_ref.shape
    n_chunks = HW // chunk

    w = w_ref[...]
    b = b_ref[...]

    # Sweep 1: sum and sum-of-squares (single pass, f32 accumulation).
    s = jnp.zeros((), jnp.float32)
    sq = jnp.zeros((), jnp.float32)
    for i in range(n_chunks):
        xc = x_ref[:, i * chunk:(i + 1) * chunk].astype(jnp.float32)
        s = s + jnp.sum(xc)
        sq = sq + jnp.sum(xc * xc)
    mean = s * inv_n
    var = jnp.maximum(sq * inv_n - mean * mean, 0.0)  # cancellation guard
    rstd = lax.rsqrt(var + EPS)

    # Sweep 2: normalize + conv (affine/bias already folded into w/b).
    for i in range(n_chunks):
        xc = x_ref[:, i * chunk:(i + 1) * chunk].astype(jnp.float32)
        xn = (xc - mean) * rstd
        o_ref[:, i * chunk:(i + 1) * chunk] = _conv1x1(
            xn, w, b, use_mxu).astype(o_ref.dtype)


def _stats_kernel(x_ref, mean_ref, rstd_ref, sum_ref, sq_ref, *, inv_n):
    """Tiled path, pass 1: accumulate sum / sumsq over HW tiles per sample."""
    t = pl.program_id(1)

    @pl.when(t == 0)
    def _():
        sum_ref[...] = jnp.zeros_like(sum_ref)
        sq_ref[...] = jnp.zeros_like(sq_ref)

    x = x_ref[...].astype(jnp.float32)                 # (C, STATS_TILE)
    # NOTE: reduction uses the XLU; pass 1 stays DMA-bound at these tile sizes.
    sum_ref[...] += jnp.sum(x, keepdims=True)
    sq_ref[...] += jnp.sum(x * x, keepdims=True)

    @pl.when(t == pl.num_programs(1) - 1)
    def _():
        mean = sum_ref[...] * inv_n
        var = jnp.maximum(sq_ref[...] * inv_n - mean * mean, 0.0)
        mean_ref[...] = mean
        rstd_ref[...] = lax.rsqrt(var + EPS)


def _apply_kernel(mean_ref, rstd_ref, x_ref, w_ref, b_ref, o_ref, *, use_mxu):
    """Tiled path, pass 2: normalize tile + folded 1x1 conv.

    mean / rstd are per-sample scalars living in SMEM (lane-dense tile path
    keeps the vld slots for x / w).
    """
    b = pl.program_id(0)
    mean = mean_ref[b]
    rstd = rstd_ref[b]
    x = x_ref[...].astype(jnp.float32)                 # (C, HW_TILE)
    xn = (x - mean) * rstd                             # f32 element-wise (v5e-safe)
    o_ref[...] = _conv1x1(xn, w_ref[...], b_ref[...], use_mxu).astype(o_ref.dtype)


def prenorm_conv1x1(x_nchw, gamma, beta, conv_w, conv_b, *,
                    hw_tile=None, stats_hw_tile=None):
    """PreNorm(dim, Conv2d(dim, dim, 1)): GroupNorm(1, C) then 1x1 conv.

    x_nchw: (B, C, H, W). gamma/beta: (C,). conv_w: (C, C) or (C, C, 1, 1).
    conv_b: (C,). hw_tile / stats_hw_tile: optional overrides (force the tiled
    two-pass path; must divide padded H*W and be multiples of 128).

    The GroupNorm affine and the conv bias are folded into the conv weights:
        W @ (xn*gamma + beta) + b  ==  (W*gamma[None,:]) @ xn + (b + W@beta)
    This is exact and valid ONLY because the wrapped `function` is a linear
    1x1 convolution.
    """
    B, C, H, W = x_nchw.shape
    HW = H * W
    x = x_nchw.reshape(B, C, HW)

    w = conv_w.reshape(C, C).astype(jnp.float32)
    w_eff = w * gamma.astype(jnp.float32)[None, :]
    b_eff = (conv_b.astype(jnp.float32) + w @ beta.astype(jnp.float32)).reshape(C, 1)

    use_mxu = C >= MXU_MIN_C
    if use_mxu:
        # bf16 weights are MXU-native on v5e/v6e/v7x; halves weight DMA and
        # removes a per-tile VPU cast.  Element-wise math stays f32.
        w_eff = w_eff.astype(jnp.bfloat16)

    inv_n = 1.0 / float(C * HW)
    slab_bytes = C * HW * 4

    _, vmem_limit = _tpu_budgets()
    fused_slab_max = vmem_limit // 8     # ~6 MiB on v7x, ~12 MiB on v5e/v6e
    fused_chunk_max = vmem_limit // 16   # bounds in-kernel temporaries
    apply_tile_max = vmem_limit // 10    # in+out double-buffered + temps + w
    stats_tile_max = vmem_limit // 5     # pass 1 only streams x

    force_tiled = hw_tile is not None or stats_hw_tile is not None
    # On multi-TC parts (v7x), a single-sample fused grid=(1,) leaves a core
    # idle; prefer the tiled path so the HW axis can be sharded.
    prefer_tiled_for_cores = (B == 1 and HW >= 256 and slab_bytes > 2 * _MIB
                              and _num_tensorcores() >= 2)
    use_fused = (not force_tiled
                 and slab_bytes <= fused_slab_max
                 and not prefer_tiled_for_cores)

    if use_fused:
        # --- Fused single-pass kernel: one VMEM-resident (C, HW) slab/sample.
        chunk = HW
        for t in _TILE_CANDIDATES:
            if HW % t == 0 and C * t * 4 <= max(fused_chunk_max, C * 128 * 4):
                chunk = t
                break
        out = pl.pallas_call(
            partial(_fused_kernel, inv_n=inv_n, use_mxu=use_mxu, chunk=chunk),
            out_shape=jax.ShapeDtypeStruct((B, C, HW), x.dtype),
            grid_spec=pltpu.PrefetchScalarGridSpec(
                num_scalar_prefetch=0,
                grid=(B,),
                in_specs=[
                    pl.BlockSpec((pl.Squeezed(), C, HW), lambda b: (b, 0, 0)),
                    pl.BlockSpec((C, C), lambda b: (0, 0)),
                    pl.BlockSpec((C, 1), lambda b: (0, 0)),
                ],
                out_specs=pl.BlockSpec((pl.Squeezed(), C, HW), lambda b: (b, 0, 0)),
            ),
            compiler_params=pltpu.CompilerParams(
                dimension_semantics=("parallel",),
                vmem_limit_bytes=vmem_limit),
        )(x, w_eff, b_eff)
        return out.reshape(B, C, H, W)

    # --- Tiled two-pass pipeline (large slabs / forced / multi-core B==1). ---
    # Pad HW to a multiple of 128 so every tile is lane-dense; zero padding
    # contributes nothing to sum / sumsq (inv_n uses the real element count)
    # and the padded output columns are sliced away at the end.
    HW_pad = ((HW + 127) // 128) * 128
    if HW_pad != HW:
        x = jnp.pad(x, ((0, 0), (0, 0), (0, HW_pad - HW)))

    if hw_tile is None:
        hw_tile = 128
        for t in _TILE_CANDIDATES:
            if HW_pad % t == 0 and C * t * 4 <= apply_tile_max:
                hw_tile = t
                break
    if HW_pad % hw_tile != 0 or hw_tile % 128 != 0:
        raise ValueError("hw_tile must divide padded H*W and be a multiple of 128")

    if stats_hw_tile is None:
        # Pass 1 only double-buffers x -> give it a larger tile than pass 2.
        stats_hw_tile = hw_tile
        for t in _TILE_CANDIDATES:
            if HW_pad % t == 0 and C * t * 4 <= stats_tile_max:
                stats_hw_tile = max(t, hw_tile)
                break
    if HW_pad % stats_hw_tile != 0 or stats_hw_tile % 128 != 0:
        raise ValueError("stats_hw_tile must divide padded H*W and be a multiple of 128")

    T_stats = HW_pad // stats_hw_tile
    T_apply = HW_pad // hw_tile

    # Pass 1: per-sample mean / rstd via sum & sumsq accumulators.
    mean_b, rstd_b = pl.pallas_call(
        partial(_stats_kernel, inv_n=inv_n),
        out_shape=(jax.ShapeDtypeStruct((B, 1, 1), jnp.float32),
                   jax.ShapeDtypeStruct((B, 1, 1), jnp.float32)),
        grid_spec=pltpu.PrefetchScalarGridSpec(
            num_scalar_prefetch=0,
            grid=(B, T_stats),
            in_specs=[
                pl.BlockSpec((pl.Squeezed(), C, stats_hw_tile),
                             lambda b, t: (b, 0, t)),
            ],
            out_specs=(
                pl.BlockSpec((pl.Squeezed(), 1, 1), lambda b, t: (b, 0, 0)),
                pl.BlockSpec((pl.Squeezed(), 1, 1), lambda b, t: (b, 0, 0)),
            ),
            scratch_shapes=[pltpu.VMEM((1, 1), jnp.float32),
                            pltpu.VMEM((1, 1), jnp.float32)],
        ),
        compiler_params=pltpu.CompilerParams(
            dimension_semantics=("parallel", "arbitrary"),
            vmem_limit_bytes=vmem_limit),
    )(x)

    mean_v = mean_b.reshape(B)   # -> SMEM scalars for pass 2
    rstd_v = rstd_b.reshape(B)

    # Pass 2: normalize each HW tile and apply the folded 1x1 conv.
    out = pl.pallas_call(
        partial(_apply_kernel, use_mxu=use_mxu),
        out_shape=jax.ShapeDtypeStruct((B, C, HW_pad), x.dtype),
        grid_spec=pltpu.PrefetchScalarGridSpec(
            num_scalar_prefetch=0,
            grid=(B, T_apply),
            in_specs=[
                pl.BlockSpec(memory_space=pltpu.MemorySpace.SMEM),   # mean (B,)
                pl.BlockSpec(memory_space=pltpu.MemorySpace.SMEM),   # rstd (B,)
                pl.BlockSpec((pl.Squeezed(), C, hw_tile), lambda b, t: (b, 0, t)),
                pl.BlockSpec((C, C), lambda b, t: (0, 0)),
                pl.BlockSpec((C, 1), lambda b, t: (0, 0)),
            ],
            out_specs=pl.BlockSpec((pl.Squeezed(), C, hw_tile),
                                   lambda b, t: (b, 0, t)),
        ),
        compiler_params=pltpu.CompilerParams(
            dimension_semantics=("parallel", "parallel"),
            vmem_limit_bytes=vmem_limit),
    )(mean_v, rstd_v, x, w_eff, b_eff)

    if HW_pad != HW:
        out = out[:, :, :HW]
    return out.reshape(B, C, H, W)


def _reference(x_nchw, gamma, beta, conv_w, conv_b):
    B, C, H, W = x_nchw.shape
    xf = x_nchw.astype(jnp.float32).reshape(B, -1)
    mean = xf.mean(axis=1, keepdims=True)
    var = ((xf - mean) ** 2).mean(axis=1, keepdims=True)
    xn = ((xf - mean) / jnp.sqrt(var + EPS)).reshape(B, C, H, W)
    xn = xn * gamma[None, :, None, None] + beta[None, :, None, None]
    y = jnp.einsum("oc,bchw->bohw", conv_w.reshape(C, C), xn)
    return y + conv_b[None, :, None, None]


if __name__ == "__main__":
    key = jax.random.PRNGKey(0)

    def run_case(case_key, B, C, H, W, tol):
        kx, kg, kb, kw, kc = jax.random.split(case_key, 5)
        x = jax.random.normal(kx, (B, C, H, W), dtype=jnp.float32)
        gamma = 1.0 + 0.1 * jax.random.normal(kg, (C,), dtype=jnp.float32)
        beta = 0.1 * jax.random.normal(kb, (C,), dtype=jnp.float32)
        conv_w = jax.random.normal(kw, (C, C), dtype=jnp.float32) / jnp.sqrt(C)
        conv_b = 0.1 * jax.random.normal(kc, (C,), dtype=jnp.float32)

        ref = _reference(x, gamma, beta, conv_w, conv_b)

        out_fused = jax.block_until_ready(
            prenorm_conv1x1(x, gamma, beta, conv_w, conv_b))
        assert out_fused.shape == (B, C, H, W)
        assert jnp.allclose(out_fused, ref, atol=tol, rtol=tol), "fused mismatch"

        out_tiled = jax.block_until_ready(
            prenorm_conv1x1(x, gamma, beta, conv_w, conv_b, hw_tile=128))
        assert jnp.allclose(out_tiled, ref, atol=tol, rtol=tol), "tiled mismatch"

    k1, k2, k3 = jax.random.split(key, 3)
    # Small-C: VPU unrolled-FMA conv path, all f32 -> tight tolerance.
    run_case(k1, B=2, C=4, H=16, W=16, tol=1e-3)
    # Larger-C: MXU path with bf16 weights/operands, f32 accumulation.
    run_case(k2, B=2, C=128, H=16, W=16, tol=3e-2)
    # H*W not a multiple of 128: exercises the zero-padded tiled path.
    run_case(k3, B=2, C=8, H=12, W=12, tol=1e-3)

    print("KERNEL_OK")
</pallas_src>

<mosaic_0001>
module attributes {stable_mosaic.version = 11 : i64} {
  func.func @_fused_kernel(%arg0: i32, %arg1: memref<1x4x256xf32, #tpu.memory_space<vmem>>, %arg2: memref<4x4xf32, #tpu.memory_space<vmem>>, %arg3: memref<4x1xf32, #tpu.memory_space<vmem>>, %arg4: memref<1x4x256xf32, #tpu.memory_space<vmem>>) attributes {dimension_semantics = [#tpu.dimension_semantics<parallel>], iteration_bounds = array<i64: 2>, scalar_prefetch = 0 : i64, scratch_operands = 0 : i64, tpu.core_type = #tpu.core_type<tc>, window_params = [{transform_indices = @transform_0, window_bounds = array<i64: 1, 4, 256>}, {pipeline_mode = #tpu.pipeline_mode<synchronous>, transform_indices = @transform_1, window_bounds = array<i64: 4, 4>}, {pipeline_mode = #tpu.pipeline_mode<synchronous>, transform_indices = @transform_2, window_bounds = array<i64: 4, 1>}, {transform_indices = @transform_3, window_bounds = array<i64: 1, 4, 256>}]} {
    %c0 = arith.constant 0 : index
    %c0_0 = arith.constant 0 : index
    %0 = vector.load %arg2[%c0, %c0_0] : memref<4x4xf32, #tpu.memory_space<vmem>>, vector<4x4xf32>
    %c0_1 = arith.constant 0 : index
    %c0_2 = arith.constant 0 : index
    %1 = vector.load %arg3[%c0_1, %c0_2] : memref<4x1xf32, #tpu.memory_space<vmem>>, vector<4x1xf32>
    %c0_3 = arith.constant 0 : index
    %c0_4 = arith.constant 0 : index
    %c0_5 = arith.constant 0 : index
    %2 = vector.load %arg1[%c0_3, %c0_4, %c0_5] : memref<1x4x256xf32, #tpu.memory_space<vmem>>, vector<1x4x256xf32>
    %3 = vector.shape_cast %2 : vector<1x4x256xf32> to vector<4x256xf32>
    %4 = vector.shape_cast %3 : vector<4x256xf32> to vector<1x4x256xf32>
    %cst = arith.constant dense<0.000000e+00> : vector<1xf32>
    %5 = vector.multi_reduction <add>, %4, %cst [1, 2] : vector<1x4x256xf32> to vector<1xf32>
    %6 = vector.shape_cast %5 : vector<1xf32> to vector<1x1x1xf32>
    %7 = vector.extract %6[0, 0, 0] : f32 from vector<1x1x1xf32>
    %cst_6 = arith.constant 0.000000e+00 : f32
    %8 = arith.addf %cst_6, %7 : f32
    %9 = arith.mulf %3, %3 : vector<4x256xf32>
    %10 = vector.shape_cast %9 : vector<4x256xf32> to vector<1x4x256xf32>
    %cst_7 = arith.constant dense<0.000000e+00> : vector<1xf32>
    %11 = vector.multi_reduction <add>, %10, %cst_7 [1, 2] : vector<1x4x256xf32> to vector<1xf32>
    %12 = vector.shape_cast %11 : vector<1xf32> to vector<1x1x1xf32>
    %13 = vector.extract %12[0, 0, 0] : f32 from vector<1x1x1xf32>
    %cst_8 = arith.constant 0.000000e+00 : f32
    %14 = arith.addf %cst_8, %13 : f32
    %cst_9 = arith.constant 9.765625E-4 : f32
    %15 = arith.mulf %8, %cst_9 : f32
    %cst_10 = arith.constant 9.765625E-4 : f32
    %16 = arith.mulf %14, %cst_10 : f32
    %17 = arith.mulf %15, %15 : f32
    %18 = arith.subf %16, %17 : f32
    %cst_11 = arith.constant 0.000000e+00 : f32
    %19 = arith.maximumf %18, %cst_11 : f32
    %cst_12 = arith.constant 9.99999974E-6 : f32
    %20 = arith.addf %19, %cst_12 : f32
    %21 = math.rsqrt %20 : f32
    %c0_13 = arith.constant 0 : index
    %c0_14 = arith.constant 0 : index
    %c0_15 = arith.constant 0 : index
    %22 = vector.load %arg1[%c0_13, %c0_14, %c0_15] : memref<1x4x256xf32, #tpu.memory_space<vmem>>, vector<1x4x256xf32>
    %23 = vector.shape_cast %22 : vector<1x4x256xf32> to vector<4x256xf32>
    %24 = vector.broadcast %15 : f32 to vector<4x256xf32>
    %25 = arith.subf %23, %24 : vector<4x256xf32>
    %26 = vector.broadcast %21 : f32 to vector<4x256xf32>
    %27 = arith.mulf %25, %26 : vector<4x256xf32>
    %28 = vector.extract_strided_slice %0 {offsets = [0, 0], sizes = [4, 1], strides = [1, 1]} : vector<4x4xf32> to vector<4x1xf32>
    %29 = vector.extract_strided_slice %27 {offsets = [0, 0], sizes = [1, 256], strides = [1, 1]} : vector<4x256xf32> to vector<1x256xf32>
    %30 = vector.broadcast %28 : vector<4x1xf32> to vector<4x256xf32>
    %31 = vector.broadcast %29 : vector<1x256xf32> to vector<4x256xf32>
    %32 = arith.mulf %30, %31 : vector<4x256xf32>
    %33 = vector.extract_strided_slice %0 {offsets = [0, 1], sizes = [4, 1], strides = [1, 1]} : vector<4x4xf32> to vector<4x1xf32>
    %34 = vector.extract_strided_slice %27 {offsets = [1, 0], sizes = [1, 256], strides = [1, 1]} : vector<4x256xf32> to vector<1x256xf32>
    %35 = vector.broadcast %33 : vector<4x1xf32> to vector<4x256xf32>
    %36 = vector.broadcast %34 : vector<1x256xf32> to vector<4x256xf32>
    %37 = arith.mulf %35, %36 : vector<4x256xf32>
    %38 = arith.addf %32, %37 : vector<4x256xf32>
    %39 = vector.extract_strided_slice %0 {offsets = [0, 2], sizes = [4, 1], strides = [1, 1]} : vector<4x4xf32> to vector<4x1xf32>
    %40 = vector.extract_strided_slice %27 {offsets = [2, 0], sizes = [1, 256], strides = [1, 1]} : vector<4x256xf32> to vector<1x256xf32>
    %41 = vector.broadcast %39 : vector<4x1xf32> to vector<4x256xf32>
    %42 = vector.broadcast %40 : vector<1x256xf32> to vector<4x256xf32>
    %43 = arith.mulf %41, %42 : vector<4x256xf32>
    %44 = arith.addf %38, %43 : vector<4x256xf32>
    %45 = vector.extract_strided_slice %0 {offsets = [0, 3], sizes = [4, 1], strides = [1, 1]} : vector<4x4xf32> to vector<4x1xf32>
    %46 = vector.extract_strided_slice %27 {offsets = [3, 0], sizes = [1, 256], strides = [1, 1]} : vector<4x256xf32> to vector<1x256xf32>
    %47 = vector.broadcast %45 : vector<4x1xf32> to vector<4x256xf32>
    %48 = vector.broadcast %46 : vector<1x256xf32> to vector<4x256xf32>
    %49 = arith.mulf %47, %48 : vector<4x256xf32>
    %50 = arith.addf %44, %49 : vector<4x256xf32>
    %51 = vector.broadcast %1 : vector<4x1xf32> to vector<4x256xf32>
    %52 = arith.addf %50, %51 : vector<4x256xf32>
    %c0_16 = arith.constant 0 : index
    %c0_17 = arith.constant 0 : index
    %c0_18 = arith.constant 0 : index
    %53 = vector.load %arg4[%c0_16, %c0_17, %c0_18] : memref<1x4x256xf32, #tpu.memory_space<vmem>>, vector<1x4x256xf32>
    %54 = vector.shape_cast %53 : vector<1x4x256xf32> to vector<4x256xf32>
    %55 = vector.shape_cast %52 : vector<4x256xf32> to vector<1x4x256xf32>
    tpu.vector_store %arg4[%c0_16, %c0_17, %c0_18], %55 {strides = array<i32>} : memref<1x4x256xf32, #tpu.memory_space<vmem>>, vector<1x4x256xf32>,
    return
  }
  func.func @transform_0(%arg0: i32) -> (i32, i32, i32) {
    %c0_i32 = arith.constant 0 : i32
    %c0_i32_0 = arith.constant 0 : i32
    %c0_i32_1 = arith.constant 0 : i32
    return %arg0, %c0_i32, %c0_i32_0 : i32, i32, i32
  }
  func.func @transform_1(%arg0: i32) -> (i32, i32) {
    %c0_i32 = arith.constant 0 : i32
    %c0_i32_0 = arith.constant 0 : i32
    %c0_i32_1 = arith.constant 0 : i32
    return %c0_i32, %c0_i32_0 : i32, i32
  }
  func.func @transform_2(%arg0: i32) -> (i32, i32) {
    %c0_i32 = arith.constant 0 : i32
    %c0_i32_0 = arith.constant 0 : i32
    %c0_i32_1 = arith.constant 0 : i32
    return %c0_i32, %c0_i32_0 : i32, i32
  }
  func.func @transform_3(%arg0: i32) -> (i32, i32, i32) {
    %c0_i32 = arith.constant 0 : i32
    %c0_i32_0 = arith.constant 0 : i32
    %c0_i32_1 = arith.constant 0 : i32
    return %arg0, %c0_i32, %c0_i32_0 : i32, i32, i32
  }
}

</mosaic_0001>

<llo_original>
// kernel: tpu_custom_call.1
$region0: #{tpu_custom_call.1}
  #allocation0 [shape = 'u32[]', space=smem, size = 0x4, offset = 0x4, fixed_abs, tag = 'smem constant byte address 0x4 - core index']
  #allocation1 [shape = 'u32[144,128]{1,0:T(1,128)}', space=vmem, size = 0x12000, scoped, tag = 'internal scratch']
  %s0 = inlined_call_operand.hbm [shape: f32[2,4,256], index: 0, kind: input, shape index: {}]
  %s1 = inlined_call_operand.vmem [shape: f32[4,4], index: 1, kind: input, shape index: {}]
  %s2 = inlined_call_operand.vmem [shape: f32[4,1], index: 2, kind: input, shape index: {}]
  %s3 = inlined_call_operand.hbm [shape: f32[2,4,256], index: 3, kind: output, shape index: {}]
  %s4 = sld [smem:[#allocation0]]
  $region49: #{tpu_custom_call.1} parent=0
    _
  %s6 = ssub.s32 1, %s4
  %s7 = scalar_select 0, %s6, %s4
  $region1: #{tpu_custom_call.1} parent=0
    #allocation2 [shape = 'u8[8192]{0}', space=vmem, size = 0x2000, scoped, tag = 'input window, operand 0']
    #allocation3 [shape = 's32[2]{0}', space=sflag, size = 0x8, scoped, tag = 'scoped memory for tpu_custom_call.1']
    #allocation4 [shape = 's32[2]{0}', space=sflag, size = 0x8, scoped, tag = 'scoped memory for tpu_custom_call.1']
    #allocation5 [shape = 'u8[8192]{0}', space=vmem, size = 0x2000, scoped, tag = 'output window, operand 0']
    %8 = vsyncpa [#allocation3], 0
    %s9 = scalar_lea.sflag [#allocation3], 1
    %10 = vsyncpa %s9, 0
    %11 = vsyncpa [#allocation4], 0
    %s12 = scalar_lea.sflag [#allocation4], 1
    %13 = vsyncpa %s12, 0
    loop: start=0, step=1, limit=4
    $region2: #{tpu_custom_call.1} parent=1 // loop_pre_header
      _
    $region3: #{tpu_custom_call.1} parent=1 // loop_header
      %s15 = sphi 0, %s19
      %p16 = scmp.ge.s32.totalorder %s15, 4
      %s25 = sphi 0, %s27
      %s28 = sphi 0, %s25
      %s29 = sphi 0, %s28
      %s45 = sphi 0, %s29
      %s49 = sphi 0, %s49
      %s51 = sphi 0, %s49
      %s52 = sphi 0, %s51
      %s66 = sphi 0, %s52
      %s70 = sphi 0, %s70
      %s72 = sphi 0, %s70
      %s73 = sphi 0, %s72
      %s87 = sphi 0, %s73
      %s93 = sphi 0, %s95
      %s96 = sphi 0, %s93
      %s97 = sphi 0, %s96
      %s113 = sphi 0, %s97
    $region4: #{tpu_custom_call.1} parent=1 // loop_header_branch
      %18 = sbr.rel (%p16) target = $region8
    $region5: #{tpu_custom_call.1} parent=1 // loop_body
      %s20 = ssub.s32 %s15, 1
      %s21 = ssub.s32 %s15, 2
      %s22 = sadd.s32 %s15, 1
      %s23 = ssub.s32 %s15, %s22
      %p24 = scmp.eq.s32.totalorder %s23, 0
      %s26 = sadd.s32 %s25, 1
      %s27 = scalar_select %p24, %s25, %s26
      %p30 = pneg %p24
      %p31 = scmp.eq.s32.totalorder %s15, 1
      %p32 = por %p30, %p31
      %p33 = scmp.ne.s32.totalorder %s25, %s28
      %p34 = scmp.eq.s32.totalorder %s15, 0
      %p35 = por %p33, %p34
      %p36 = scmp.ne.s32.totalorder %s25, %s28
      %p37 = scmp.eq.s32.totalorder %s20, 1
      %p38 = por %p36, %p37
      %p39 = scmp.ne.s32.totalorder %s28, %s29
      %p40 = scmp.eq.s32.totalorder %s20, 0
      %p41 = por %p39, %p40
      %p42 = scmp.ne.s32.totalorder %s28, %s29
      %p43 = scmp.eq.s32.totalorder %s21, 1
      %p44 = por %p42, %p43
      %p46 = scmp.ne.s32.totalorder %s29, %s45
      %p47 = scmp.eq.s32.totalorder %s21, 0
      %p48 = por %p46, %p47
      %s50 = sadd.s32 %s49, 1
      %p53 = scmp.eq.s32.totalorder %s15, 1
      %p54 = scmp.ne.s32.totalorder %s49, %s51
      %p55 = scmp.eq.s32.totalorder %s15, 0
      %p56 = por %p54, %p55
      %p57 = scmp.ne.s32.totalorder %s49, %s51
      %p58 = scmp.eq.s32.totalorder %s20, 1
      %p59 = por %p57, %p58
      %p60 = scmp.ne.s32.totalorder %s51, %s52
      %p61 = scmp.eq.s32.totalorder %s20, 0
      %p62 = por %p60, %p61
      %p63 = scmp.ne.s32.totalorder %s51, %s52
      %p64 = scmp.eq.s32.totalorder %s21, 1
      %p65 = por %p63, %p64
      %p67 = scmp.ne.s32.totalorder %s52, %s66
      %p68 = scmp.eq.s32.totalorder %s21, 0
      %p69 = por %p67, %p68
      %s71 = sadd.s32 %s70, 1
      %p74 = scmp.eq.s32.totalorder %s15, 1
      %p75 = scmp.ne.s32.totalorder %s70, %s72
      %p76 = scmp.eq.s32.totalorder %s15, 0
      %p77 = por %p75, %p76
      %p78 = scmp.ne.s32.totalorder %s70, %s72
      %p79 = scmp.eq.s32.totalorder %s20, 1
      %p80 = por %p78, %p79
      %p81 = scmp.ne.s32.totalorder %s72, %s73
      %p82 = scmp.eq.s32.totalorder %s20, 0
      %p83 = por %p81, %p82
      %p84 = scmp.ne.s32.totalorder %s72, %s73
      %p85 = scmp.eq.s32.totalorder %s21, 1
      %p86 = por %p84, %p85
      %p88 = scmp.ne.s32.totalorder %s73, %s87
      %p89 = scmp.eq.s32.totalorder %s21, 0
      %p90 = por %p88, %p89
      %s91 = ssub.s32 %s15, %s22
      %p92 = scmp.eq.s32.totalorder %s91, 0
      %s94 = sadd.s32 %s93, 1
      %s95 = scalar_select %p92, %s93, %s94
      %p98 = pneg %p92
      %p99 = scmp.eq.s32.totalorder %s15, 1
      %p100 = por %p98, %p99
      %p101 = scmp.ne.s32.totalorder %s93, %s96
      %p102 = scmp.eq.s32.totalorder %s15, 0
      %p103 = por %p101, %p102
      %p104 = scmp.ne.s32.totalorder %s93, %s96
      %p105 = scmp.eq.s32.totalorder %s20, 1
      %p106 = por %p104, %p105
      %p107 = scmp.ne.s32.totalorder %s96, %s97
      %p108 = scmp.eq.s32.totalorder %s20, 0
      %p109 = por %p107, %p108
      %p110 = scmp.ne.s32.totalorder %s96, %s97
      %p111 = scmp.eq.s32.totalorder %s21, 1
      %p112 = por %p110, %p111
      %p114 = scmp.ne.s32.totalorder %s97, %s113
      %p115 = scmp.eq.s32.totalorder %s21, 0
      %p116 = por %p114, %p115
      %p117 = scmp.le.s32.totalorder 1, %s15
      %p118 = scmp.lt.s32.totalorder %s15, 3
      %p119 = pnand %p117, %p118
      %p120 = pneg %p119
      // Predicated region
      $region9: #{tpu_custom_call.1} parent=5 // pred_check
        _
      $region10: #{tpu_custom_call.1} parent=5 // pred_check_branch
        %122 = sbr.rel (%p119) target = $region12
      $region11: #{tpu_custom_call.1} parent=5 // pred_region
        %s123 = ssub.s32 %s15, 1
        // Predicated region
        $region13: #{tpu_custom_call.1} parent=11 // pred_check
          %p124 = pneg %p62
        $region14: #{tpu_custom_call.1} parent=11 // pred_check_branch
          %126 = sbr.rel (%p124) target = $region16
        $region15: #{tpu_custom_call.1} parent=11 // pred_region
          _
        $region16: #{tpu_custom_call.1} parent=11 // pred_fallthru
          _
        // Predicated region
        $region17: #{tpu_custom_call.1} parent=11 // pred_check
          %p127 = pneg %p83
        $region18: #{tpu_custom_call.1} parent=11 // pred_check_branch
          %129 = sbr.rel (%p127) target = $region20
        $region19: #{tpu_custom_call.1} parent=11 // pred_region
          _
        $region20: #{tpu_custom_call.1} parent=11 // pred_fallthru
          _
      $region12: #{tpu_custom_call.1} parent=5 // pred_fallthru
        _
      %p130 = scmp.lt.s32.totalorder %s15, 2
      // Predicated region
      $region21: #{tpu_custom_call.1} parent=5 // pred_check
        %p131 = pneg %p130
      $region22: #{tpu_custom_call.1} parent=5 // pred_check_branch
        %133 = sbr.rel (%p131) target = $region24
      $region23: #{tpu_custom_call.1} parent=5 // pred_region
        // Predicated region
        $region25: #{tpu_custom_call.1} parent=23 // pred_check
          %p134 = pneg %p35
        $region26: #{tpu_custom_call.1} parent=23 // pred_check_branch
          %136 = sbr.rel (%p134) target = $region28
        $region27: #{tpu_custom_call.1} parent=23 // pred_region
          %s137 = sand.u32 %s25, 1
          %s138 = scalar_lea.sflag [#allocation3], %s137
          %s139 = sand.u32 %s25, 1
          %s140 = smul.addr %s139, 8
          %s141 = scalar_lea.vmem [#allocation2], %s140
          %s143 = ssub.s32 128, 128
          %144 = vsyncadd %s138, %s143
          %s145 = smul.addr %s15, 2
          %s146 = smul.addr %s145, 64
          %s147 = scalar_lea.hbm %s0, %s146
          %s149 = sshll.u32 %s141, 4
          %s150 = int_to_ptr.vmem [resolvable:$true] %s149
          %152 = dma.hbm_to_vmem [thread:$0]  %s147, 128, %s150, %s138
        $region28: #{tpu_custom_call.1} parent=23 // pred_fallthru
          _
      $region24: #{tpu_custom_call.1} parent=5 // pred_fallthru
        _
      %p153 = scmp.le.s32.totalorder 1, %s15
      %p154 = scmp.lt.s32.totalorder %s15, 3
      %p155 = pnand %p153, %p154
      %p156 = pneg %p155
      // Predicated region
      $region29: #{tpu_custom_call.1} parent=5 // pred_check
        _
      $region30: #{tpu_custom_call.1} parent=5 // pred_check_branch
        %158 = sbr.rel (%p155) target = $region32
      $region31: #{tpu_custom_call.1} parent=5 // pred_region
        %s159 = ssub.s32 %s15, 1
        %s160 = sand.u32 %s28, 1
        %s161 = scalar_lea.sflag [#allocation3], %s160
        %s162 = sand.u32 %s28, 1
        %s163 = smul.addr %s162, 8
        %s164 = scalar_lea.vmem [#allocation2], %s163
        // Predicated region
        $region33: #{tpu_custom_call.1} parent=31 // pred_check
          %p165 = pneg %p41
        $region34: #{tpu_custom_call.1} parent=31 // pred_check_branch
          %167 = sbr.rel (%p165) target = $region36
        $region35: #{tpu_custom_call.1} parent=31 // pred_region
          %168 = dma.done %s161, 128
        $region36: #{tpu_custom_call.1} parent=31 // pred_fallthru
          _
        %s169 = sand.u32 %s28, 1
        %s170 = scalar_lea.sflag [#allocation3], %s169
        %s171 = sand.u32 %s28, 1
        %s172 = smul.addr %s171, 8
        %s173 = scalar_lea.vmem [#allocation2], %s172
        %p174 = pneg %p41
        %p175 = pneg %p38
        %p176 = pneg %p62
        %p177 = pneg %p59
        %p178 = pneg %p83
        %p179 = pneg %p80
        %p180 = pneg %p109
        %p181 = pneg %p106
        %s182 = sand.u32 %s96, 1
        %s183 = scalar_lea.sflag [#allocation4], %s182
        %s184 = sand.u32 %s96, 1
        %s185 = smul.addr %s184, 8
        %s186 = scalar_lea.vmem [#allocation5], %s185
        %v187 = vld [vmem:[%s1] sm:$0xf]
        %v188 = vld [vmem:[%s2] sm:$0xf]
        %v189 = vld [vmem:[%s164] sm:$0xff]
        %v191 = vcombine.high %v189, %v189
        %vm193 = vcmask 1043456
        %v194 = vsel %vm193, %v189, 0.0
        %v195 = vsel %vm193, %v191, 0.0
        %v196 = vadd.f32 %v194, %v195
        %197 = vadd.xlane.f32.xlu0 %v196
        %v198 = vpop.xlane.xlu0 %197
        %v199 = vrot.slane %v198, 4
        %v200 = vadd.f32 %v198, %v199
        %v201 = vrot.slane %v200, 2
        %v202 = vadd.f32 %v200, %v201
        %v203 = vrot.slane %v202, 1
        %v204 = vadd.f32 %v202, %v203
        %s205 = vtos %v204
        %s206 = sadd.f32 %s205, 0.0
        %v207 = vmul.f32 %v189, %v189
        %v209 = vcombine.high %v207, %v207
        %v211 = vsel %vm193, %v207, 0.0
        %v212 = vsel %vm193, %v209, 0.0
        %v213 = vadd.f32 %v211, %v212
        %214 = vadd.xlane.f32.xlu0 %v213
        %v215 = vpop.xlane.xlu0 %214
        %v216 = vrot.slane %v215, 4
        %v217 = vadd.f32 %v215, %v216
        %v218 = vrot.slane %v217, 2
        %v219 = vadd.f32 %v217, %v218
        %v220 = vrot.slane %v219, 1
        %v221 = vadd.f32 %v219, %v220
        %s222 = vtos %v221
        %s223 = sadd.f32 %s222, 0.0
        %s224 = smul.f32 %s206, 0.0009765625
        %s225 = smul.f32 %s223, 0.0009765625
        %s226 = smul.f32 %s224, %s224
        %s227 = ssub.f32 %s225, %s226
        %s228 = smax.f32 %s227, 0.0
        %s229 = sadd.f32 %s228, 1e-05
        %v230 = vstv %s229
        %v231 = vrsqrt.pop %v230
        %s232 = vtos %v231
        %v233 = vstv %s224
        %v234 = vsub.f32 %v189, %v233
        %v235 = vstv %s232
        %v236 = vmul.f32 %v234, %v235
        %238 = vset.pattern.permute.xlu0 0
        %239 = vperm.xlu0 %238, %v187
        %v240 = vpop.permute.xlu0 %239
        %v243 = vlaneseq
        %v244 = vshrl.u32 %v243, 7
        %v245 = vsub.s32 0, %v244
        %v246 = vrot.slane %v236, %v245
        %v247 = vlaneseq
        %v248 = vshrl.u32 %v247, 7
        %v249 = vsub.s32 4, %v248
        %v250 = vrot.slane %v236, %v249
        %v253 = vlaneseq
        %v254 = vshrl.u32 %v253, 7
        %v255 = vsub.s32 0, %v254
        %v256 = vrot.slane %v246, %v255
        %v257 = vlaneseq
        %v258 = vshrl.u32 %v257, 7
        %v259 = vsub.s32 0, %v258
        %v260 = vrot.slane %v250, %v259
        %v261 = vmul.f32 %v240, %v256
        %v262 = vmul.f32 %v240, %v260
        %263 = vset.pattern.permute.xlu0 1
        %264 = vperm.xlu0 %263, %v187
        %v265 = vpop.permute.xlu0 %264
        %v267 = vlaneseq
        %v268 = vshrl.u32 %v267, 7
        %v269 = vsub.s32 1, %v268
        %v270 = vrot.slane %v236, %v269
        %v271 = vlaneseq
        %v272 = vshrl.u32 %v271, 7
        %v273 = vsub.s32 5, %v272
        %v274 = vrot.slane %v236, %v273
        %v277 = vlaneseq
        %v278 = vshrl.u32 %v277, 7
        %v279 = vsub.s32 1, %v278
        %v280 = vrot.slane %v270, %v279
        %v281 = vlaneseq
        %v282 = vshrl.u32 %v281, 7
        %v283 = vsub.s32 1, %v282
        %v284 = vrot.slane %v274, %v283
        %v285 = vmul.f32 %v265, %v280
        %v286 = vmul.f32 %v265, %v284
        %v287 = vadd.f32 %v261, %v285
        %v288 = vadd.f32 %v262, %v286
        %289 = vset.pattern.permute.xlu0 2
        %290 = vperm.xlu0 %289, %v187
        %v291 = vpop.permute.xlu0 %290
        %v293 = vlaneseq
        %v294 = vshrl.u32 %v293, 7
        %v295 = vsub.s32 2, %v294
        %v296 = vrot.slane %v236, %v295
        %v297 = vlaneseq
        %v298 = vshrl.u32 %v297, 7
        %v299 = vsub.s32 6, %v298
        %v300 = vrot.slane %v236, %v299
        %v303 = vlaneseq
        %v304 = vshrl.u32 %v303, 7
        %v305 = vsub.s32 2, %v304
        %v306 = vrot.slane %v296, %v305
        %v307 = vlaneseq
        %v308 = vshrl.u32 %v307, 7
        %v309 = vsub.s32 2, %v308
        %v310 = vrot.slane %v300, %v309
        %v311 = vmul.f32 %v291, %v306
        %v312 = vmul.f32 %v291, %v310
        %v313 = vadd.f32 %v287, %v311
        %v314 = vadd.f32 %v288, %v312
        %315 = vset.pattern.permute.xlu0 3
        %316 = vperm.xlu0 %315, %v187
        %v317 = vpop.permute.xlu0 %316
        %v319 = vlaneseq
        %v320 = vshrl.u32 %v319, 7
        %v321 = vsub.s32 3, %v320
        %v322 = vrot.slane %v236, %v321
        %v323 = vlaneseq
        %v324 = vshrl.u32 %v323, 7
        %v325 = vsub.s32 7, %v324
        %v326 = vrot.slane %v236, %v325
        %v329 = vlaneseq
        %v330 = vshrl.u32 %v329, 7
        %v331 = vsub.s32 3, %v330
        %v332 = vrot.slane %v322, %v331
        %v333 = vlaneseq
        %v334 = vshrl.u32 %v333, 7
        %v335 = vsub.s32 3, %v334
        %v336 = vrot.slane %v326, %v335
        %v337 = vmul.f32 %v317, %v332
        %v338 = vmul.f32 %v317, %v336
        %v339 = vadd.f32 %v313, %v337
        %v340 = vadd.f32 %v314, %v338
        %342 = vset.pattern.permute.xlu0 0
        %343 = vperm.xlu0 %342, %v188
        %v344 = vpop.permute.xlu0 %343
        %v346 = vadd.f32 %v339, %v344
        %v347 = vadd.f32 %v340, %v344
        %v350 = vcombine.low %v346, %v347
        %352 = vst [vmem:[%s186] sm:$0xff] %v350
        %s353 = sand.u32 %s96, 1
        %s354 = scalar_lea.sflag [#allocation4], %s353
        %s355 = sand.u32 %s96, 1
        %s356 = smul.addr %s355, 8
        %s357 = scalar_lea.vmem [#allocation5], %s356
        // Predicated region
        $region37: #{tpu_custom_call.1} parent=31 // pred_check
          %p358 = pneg %p106
        $region38: #{tpu_custom_call.1} parent=31 // pred_check_branch
          %360 = sbr.rel (%p358) target = $region40
        $region39: #{tpu_custom_call.1} parent=31 // pred_region
          %s362 = ssub.s32 128, 128
          %363 = vsyncadd %s354, %s362
          %s364 = smul.addr %s20, 2
          %s365 = smul.addr %s364, 64
          %s366 = scalar_lea.hbm %s3, %s365
          %s368 = sshll.u32 %s357, 4
          %s369 = int_to_ptr.vmem [resolvable:$true] %s368
          %371 = dma.vmem_to_hbm [thread:$0]  %s369, 128, %s366, %s354
        $region40: #{tpu_custom_call.1} parent=31 // pred_fallthru
          _
      $region32: #{tpu_custom_call.1} parent=5 // pred_fallthru
        _
      %p372 = scmp.le.s32.totalorder 2, %s15
      // Predicated region
      $region41: #{tpu_custom_call.1} parent=5 // pred_check
        %p373 = pneg %p372
      $region42: #{tpu_custom_call.1} parent=5 // pred_check_branch
        %375 = sbr.rel (%p373) target = $region44
      $region43: #{tpu_custom_call.1} parent=5 // pred_region
        %s376 = ssub.s32 %s15, 2
        // Predicated region
        $region45: #{tpu_custom_call.1} parent=43 // pred_check
          %p377 = pneg %p112
        $region46: #{tpu_custom_call.1} parent=43 // pred_check_branch
          %379 = sbr.rel (%p377) target = $region48
        $region47: #{tpu_custom_call.1} parent=43 // pred_region
          %s380 = sand.u32 %s97, 1
          %s381 = scalar_lea.sflag [#allocation4], %s380
          %s382 = sand.u32 %s97, 1
          %s383 = smul.addr %s382, 8
          %s384 = scalar_lea.vmem [#allocation5], %s383
          %385 = dma.done %s381, 128
        $region48: #{tpu_custom_call.1} parent=43 // pred_fallthru
          _
      $region44: #{tpu_custom_call.1} parent=5 // pred_fallthru
        _
    $region6: #{tpu_custom_call.1} parent=1 // loop_footer
      %s19 = sadd.s32 1, %s15
    $region7: #{tpu_custom_call.1} parent=1 // loop_footer_branch
      %14 = sbr.rel target = $region3
    $region8: #{tpu_custom_call.1} parent=1 // loop_exit
      _
    %386 = vsyncpa [#allocation3], 1
    %s387 = scalar_lea.sflag [#allocation3], 1
    %388 = vsyncpa %s387, 1
    %389 = vsyncpa [#allocation4], 1
    %s390 = scalar_lea.sflag [#allocation4], 1
    %391 = vsyncpa %s390, 1

</llo_original>
